<compile_context>
chip_gen: v7x
topology: tpu7x:2x2x1
jax: 0.10.0
libtpu: 0.0.40
codegen_flags: <defaults>
</compile_context>

<pallas_src>
import functools

import jax
import jax.numpy as jnp
from jax.experimental import pallas as pl
from jax.experimental.pallas import tpu as pltpu


# ------------------------------- Pallas kernel ------------------------------ #

_VMEM_SPEC = pl.BlockSpec(memory_space=pltpu.MemorySpace.VMEM)


def _fused_mlp_kernel(*refs, relu_flags):
    """Whole Q-network as one chain of (matmul + bias [+ ReLU]) in VMEM.

    refs = (x_ref, w_0..w_{n-1}, b_0..b_{n-1}, o_ref); relu_flags is a static
    tuple of Python bools (one per layer).
    """
    n = len(relu_flags)
    x_ref = refs[0]
    w_refs = refs[1:1 + n]
    b_refs = refs[1 + n:1 + 2 * n]
    o_ref = refs[-1]

    h = x_ref[...]
    for i, relu in enumerate(relu_flags):
        # MXU matmul with f32 accumulation; f32 epilogue (bias + ReLU) keeps
        # the VPU path cheap on v5e as well.
        h = jnp.dot(h, w_refs[i][...], preferred_element_type=jnp.float32)
        h = h + b_refs[i][...]            # b is (1, out) -> broadcast over batch
        if relu:
            h = jnp.maximum(h, 0.0)
    o_ref[...] = h.astype(o_ref.dtype)


# ------------------------------ forward wrapper ----------------------------- #

@functools.partial(jax.jit, static_argnums=(2,))
def q_network_forward(weights, biases, relu_flags, state):
    """Runs the fully fused Q-network.  `weights`/`biases` come from
    `prepare_params`; `relu_flags` is a static tuple of bools."""
    B = state.shape[0]
    A = weights[-1].shape[1]
    n = len(relu_flags)

    # Keep the batch sublane-dense (f32 sublane group = 8 rows).
    Bp = ((B + 7) // 8) * 8
    x = state if Bp == B else jnp.pad(state, ((0, Bp - B), (0, 0)))

    out = pl.pallas_call(
        functools.partial(_fused_mlp_kernel, relu_flags=relu_flags),
        out_shape=jax.ShapeDtypeStruct((Bp, A), jnp.float32),
        in_specs=[_VMEM_SPEC] * (1 + 2 * n),
        out_specs=_VMEM_SPEC,
    )(x, *weights, *biases)
    return out[:B]


# --------------------------- parameter construction ------------------------- #

def _init_linear(key, fan_in, fan_out):
    """Deterministic init mimicking PyTorch nn.Linear (uniform +-1/sqrt(fan_in))."""
    kw, kb = jax.random.split(key)
    bound = 1.0 / jnp.sqrt(jnp.float32(fan_in))
    w = jax.random.uniform(kw, (fan_in, fan_out), jnp.float32, -bound, bound)
    b = jax.random.uniform(kb, (fan_out,), jnp.float32, -bound, bound)
    return w, b


def init_q_network(key, dqn_type, layers):
    """Raw parameters matching the PyTorch module structure."""
    params = {'body': []}
    keys = jax.random.split(key, 16)
    ki = 0
    for idx in range(len(layers) - 3):
        params['body'].append(_init_linear(keys[ki], layers[idx], layers[idx + 1]))
        ki += 1
    if dqn_type == 'dueling':
        params['val'] = (_init_linear(keys[ki + 0], layers[-3], layers[-2]),
                         _init_linear(keys[ki + 1], layers[-2], 1))
        params['adv'] = (_init_linear(keys[ki + 2], layers[-3], layers[-2]),
                         _init_linear(keys[ki + 3], layers[-2], layers[-1]))
    else:
        params['head'] = (_init_linear(keys[ki + 0], layers[-3], layers[-2] * 2),
                          _init_linear(keys[ki + 1], layers[-2] * 2, layers[-1]))
    return params


def prepare_params(params, dqn_type):
    """One-time prep: fold the dueling head (stream merge + advantage-mean
    subtraction + value broadcast/add) into a plain MLP weight list, and
    pre-shape all biases to (1, out)."""
    weights, biases, relus = [], [], []
    for (w, b) in params['body']:
        weights.append(w)
        biases.append(b.reshape(1, -1))
        relus.append(True)

    if dqn_type == 'dueling':
        (wv1, bv1), (wv2, bv2) = params['val']
        (wa1, ba1), (wa2, ba2) = params['adv']
        H = wv1.shape[1]
        A = wa2.shape[1]
        # Merge first layers of both streams: [hv | ha] = relu(f @ [wv1|wa1] + [bv1|ba1])
        w1 = jnp.concatenate([wv1, wa1], axis=1)                 # (D, 2H)
        b1 = jnp.concatenate([bv1, ba1], axis=0).reshape(1, -1)  # (1, 2H)
        # Fold the advantage-mean subtraction into the adv weights: C = I - 11^T/A
        C = jnp.eye(A, dtype=jnp.float32) - jnp.full((A, A), 1.0 / A, jnp.float32)
        wa2c = wa2 @ C                                           # (H, A)
        ba2c = ba2 @ C                                           # (A,)
        # Fold the value broadcast + final add into one (2H, A) matmul:
        #   Q = [hv|ha] @ [[wv2 broadcast to A]; [wa2c]] + (bv2 + ba2c)
        w2 = jnp.concatenate([jnp.broadcast_to(wv2, (H, A)), wa2c], axis=0)  # (2H, A)
        b2 = (bv2 + ba2c).reshape(1, -1)                                     # (1, A)
        weights += [w1, w2]
        biases += [b1, b2]
        relus += [True, False]
    else:
        (w1, b1), (w2, b2) = params['head']
        weights += [w1, w2]
        biases += [b1.reshape(1, -1), b2.reshape(1, -1)]
        relus += [True, False]

    # NOTE: on v6e/v7x one could cast `weights` to bf16 here (f32 accumulation
    # stays via preferred_element_type); kept f32 — weights are a few KB and
    # the exact-f32 check below stays tight.
    return tuple(weights), tuple(biases), tuple(relus)


# ------------------------------ pure-JAX reference --------------------------- #

def q_network_reference(params, state, dqn_type):
    """Pure-JAX reference matching the PyTorch module semantics."""
    feats = state
    for (w, b) in params['body']:
        feats = jnp.maximum(feats @ w + b, 0.0)
    if dqn_type == 'dueling':
        (wv1, bv1), (wv2, bv2) = params['val']
        (wa1, ba1), (wa2, ba2) = params['adv']
        val = jnp.maximum(feats @ wv1 + bv1, 0.0) @ wv2 + bv2
        adv = jnp.maximum(feats @ wa1 + ba1, 0.0) @ wa2 + ba2
        return val + (adv - adv.mean(axis=1, keepdims=True))
    else:
        (w1, b1), (w2, b2) = params['head']
        return jnp.maximum(feats @ w1 + b1, 0.0) @ w2 + b2


# ------------------------------------ main ----------------------------------- #

if __name__ == "__main__":
    key = jax.random.PRNGKey(0)
    k_state, k_duel, k_van = jax.random.split(key, 3)

    # layers = [obs_dim, hidden1, hidden2, n_actions]; sublane-dense batch of 8.
    layers = [16, 32, 32, 4]
    batch = 8
    state = jax.random.normal(k_state, (batch, layers[0]), jnp.float32)

    # ---- Dueling DQN head ----
    duel_params = init_q_network(k_duel, 'dueling', layers)
    dw, db, drelu = prepare_params(duel_params, 'dueling')
    q_duel = q_network_forward(dw, db, drelu, state)
    q_duel = jax.block_until_ready(q_duel)
    q_duel_ref = q_network_reference(duel_params, state, 'dueling')
    assert q_duel.shape == (batch, layers[-1])
    assert jnp.allclose(q_duel, q_duel_ref, atol=1e-4, rtol=1e-4)

    # ---- Vanilla DQN head ----
    van_params = init_q_network(k_van, 'vanilla', layers)
    vw, vb, vrelu = prepare_params(van_params, 'vanilla')
    q_van = q_network_forward(vw, vb, vrelu, state)
    q_van = jax.block_until_ready(q_van)
    q_van_ref = q_network_reference(van_params, state, 'vanilla')
    assert q_van.shape == (batch, layers[-1])
    assert jnp.allclose(q_van, q_van_ref, atol=1e-4, rtol=1e-4)

    print("KERNEL_OK")
</pallas_src>

<mosaic_0001>
module attributes {stable_mosaic.version = 11 : i64} {
  func.func @_fused_mlp_kernel(%arg0: memref<8x16xf32, #tpu.memory_space<vmem>>, %arg1: memref<16x32xf32, #tpu.memory_space<vmem>>, %arg2: memref<32x64xf32, #tpu.memory_space<vmem>>, %arg3: memref<64x4xf32, #tpu.memory_space<vmem>>, %arg4: memref<1x32xf32, #tpu.memory_space<vmem>>, %arg5: memref<1x64xf32, #tpu.memory_space<vmem>>, %arg6: memref<1x4xf32, #tpu.memory_space<vmem>>, %arg7: memref<8x4xf32, #tpu.memory_space<vmem>>) attributes {dimension_semantics = [], scalar_prefetch = 0 : i64, scratch_operands = 0 : i64, tpu.core_type = #tpu.core_type<tc>} {
    %c0 = arith.constant 0 : index
    %c0_0 = arith.constant 0 : index
    %0 = vector.load %arg0[%c0, %c0_0] : memref<8x16xf32, #tpu.memory_space<vmem>>, vector<8x16xf32>
    %c0_1 = arith.constant 0 : index
    %c0_2 = arith.constant 0 : index
    %1 = vector.load %arg1[%c0_1, %c0_2] : memref<16x32xf32, #tpu.memory_space<vmem>>, vector<16x32xf32>
    %cst = arith.constant dense<0.000000e+00> : vector<8x32xf32>
    %2 = tpu.matmul %0, %1, %cst {dimension_numbers = #tpu.dot_dimension_numbers<[1], [0], [0], [1], [0, 0, 1, 1], [], []>} : vector<8x16xf32>, vector<16x32xf32>, vector<8x32xf32> -> vector<8x32xf32>
    %c0_3 = arith.constant 0 : index
    %c0_4 = arith.constant 0 : index
    %3 = vector.load %arg4[%c0_3, %c0_4] : memref<1x32xf32, #tpu.memory_space<vmem>>, vector<1x32xf32>
    %4 = vector.broadcast %3 : vector<1x32xf32> to vector<8x32xf32>
    %5 = arith.addf %2, %4 : vector<8x32xf32>
    %cst_5 = arith.constant 0.000000e+00 : f32
    %6 = vector.broadcast %cst_5 : f32 to vector<8x32xf32>
    %7 = arith.maximumf %5, %6 : vector<8x32xf32>
    %c0_6 = arith.constant 0 : index
    %c0_7 = arith.constant 0 : index
    %8 = vector.load %arg2[%c0_6, %c0_7] : memref<32x64xf32, #tpu.memory_space<vmem>>, vector<32x64xf32>
    %cst_8 = arith.constant dense<0.000000e+00> : vector<8x64xf32>
    %9 = tpu.matmul %7, %8, %cst_8 {dimension_numbers = #tpu.dot_dimension_numbers<[1], [0], [0], [1], [0, 0, 1, 1], [], []>} : vector<8x32xf32>, vector<32x64xf32>, vector<8x64xf32> -> vector<8x64xf32>
    %c0_9 = arith.constant 0 : index
    %c0_10 = arith.constant 0 : index
    %10 = vector.load %arg5[%c0_9, %c0_10] : memref<1x64xf32, #tpu.memory_space<vmem>>, vector<1x64xf32>
    %11 = vector.broadcast %10 : vector<1x64xf32> to vector<8x64xf32>
    %12 = arith.addf %9, %11 : vector<8x64xf32>
    %cst_11 = arith.constant 0.000000e+00 : f32
    %13 = vector.broadcast %cst_11 : f32 to vector<8x64xf32>
    %14 = arith.maximumf %12, %13 : vector<8x64xf32>
    %c0_12 = arith.constant 0 : index
    %c0_13 = arith.constant 0 : index
    %15 = vector.load %arg3[%c0_12, %c0_13] : memref<64x4xf32, #tpu.memory_space<vmem>>, vector<64x4xf32>
    %cst_14 = arith.constant dense<0.000000e+00> : vector<8x4xf32>
    %16 = tpu.matmul %14, %15, %cst_14 {dimension_numbers = #tpu.dot_dimension_numbers<[1], [0], [0], [1], [0, 0, 1, 1], [], []>} : vector<8x64xf32>, vector<64x4xf32>, vector<8x4xf32> -> vector<8x4xf32>
    %c0_15 = arith.constant 0 : index
    %c0_16 = arith.constant 0 : index
    %17 = vector.load %arg6[%c0_15, %c0_16] : memref<1x4xf32, #tpu.memory_space<vmem>>, vector<1x4xf32>
    %18 = vector.broadcast %17 : vector<1x4xf32> to vector<8x4xf32>
    %19 = arith.addf %16, %18 : vector<8x4xf32>
    %c0_17 = arith.constant 0 : index
    %c0_18 = arith.constant 0 : index
    %20 = vector.load %arg7[%c0_17, %c0_18] : memref<8x4xf32, #tpu.memory_space<vmem>>, vector<8x4xf32>
    tpu.vector_store %arg7[%c0_17, %c0_18], %19 {strides = array<i32>} : memref<8x4xf32, #tpu.memory_space<vmem>>, vector<8x4xf32>,
    return
  }
}

</mosaic_0001>

<llo_original>
// kernel: q_network_forward.1
$region0: #{q_network_forward.1}
  #allocation0 [shape = 'u32[]', space=smem, size = 0x4, offset = 0x4, fixed_abs, tag = 'smem constant byte address 0x4 - core index']
  #allocation1 [shape = 'u32[144,128]{1,0:T(1,128)}', space=vmem, size = 0x12000, scoped, tag = 'internal scratch']
  %s0 = inlined_call_operand.vmem [shape: f32[8,16], index: 0, kind: input, shape index: {}]
  %s1 = inlined_call_operand.vmem [shape: f32[16,32], index: 1, kind: input, shape index: {}]
  %s2 = inlined_call_operand.vmem [shape: f32[32,64], index: 2, kind: input, shape index: {}]
  %s3 = inlined_call_operand.vmem [shape: f32[64,4], index: 3, kind: input, shape index: {}]
  %s4 = inlined_call_operand.vmem [shape: f32[1,32], index: 4, kind: input, shape index: {}]
  %s5 = inlined_call_operand.vmem [shape: f32[1,64], index: 5, kind: input, shape index: {}]
  %s6 = inlined_call_operand.vmem [shape: f32[1,4], index: 6, kind: input, shape index: {}]
  %s7 = inlined_call_operand.vmem [shape: f32[8,4], index: 7, kind: output, shape index: {}]
  %s8 = sld [smem:[#allocation0]]
  $region38: #{q_network_forward.1} parent=0
    _
  %s10 = ssub.s32 1, %s8
  %s11 = scalar_select 0, %s10, %s8
  // Predicated region
  $region2: #{q_network_forward.1} parent=0 // pred_check
    _
  $region3: #{q_network_forward.1} parent=0 // pred_check_branch
    %13 = sbr.rel (0) target = $region5
  $region4: #{q_network_forward.1} parent=0 // pred_region
    _
  $region5: #{q_network_forward.1} parent=0 // pred_fallthru
    _
  // Predicated region
  $region6: #{q_network_forward.1} parent=0 // pred_check
    _
  $region7: #{q_network_forward.1} parent=0 // pred_check_branch
    %15 = sbr.rel (0) target = $region9
  $region8: #{q_network_forward.1} parent=0 // pred_region
    _
  $region9: #{q_network_forward.1} parent=0 // pred_fallthru
    _
  // Predicated region
  $region10: #{q_network_forward.1} parent=0 // pred_check
    _
  $region11: #{q_network_forward.1} parent=0 // pred_check_branch
    %17 = sbr.rel (0) target = $region13
  $region12: #{q_network_forward.1} parent=0 // pred_region
    _
  $region13: #{q_network_forward.1} parent=0 // pred_fallthru
    _
  // Predicated region
  $region14: #{q_network_forward.1} parent=0 // pred_check
    _
  $region15: #{q_network_forward.1} parent=0 // pred_check_branch
    %19 = sbr.rel (0) target = $region17
  $region16: #{q_network_forward.1} parent=0 // pred_region
    _
  $region17: #{q_network_forward.1} parent=0 // pred_fallthru
    _
  // Predicated region
  $region18: #{q_network_forward.1} parent=0 // pred_check
    _
  $region19: #{q_network_forward.1} parent=0 // pred_check_branch
    %21 = sbr.rel (0) target = $region21
  $region20: #{q_network_forward.1} parent=0 // pred_region
    _
  $region21: #{q_network_forward.1} parent=0 // pred_fallthru
    _
  // Predicated region
  $region22: #{q_network_forward.1} parent=0 // pred_check
    _
  $region23: #{q_network_forward.1} parent=0 // pred_check_branch
    %23 = sbr.rel (0) target = $region25
  $region24: #{q_network_forward.1} parent=0 // pred_region
    _
  $region25: #{q_network_forward.1} parent=0 // pred_fallthru
    _
  // Predicated region
  $region26: #{q_network_forward.1} parent=0 // pred_check
    _
  $region27: #{q_network_forward.1} parent=0 // pred_check_branch
    %25 = sbr.rel (0) target = $region29
  $region28: #{q_network_forward.1} parent=0 // pred_region
    _
  $region29: #{q_network_forward.1} parent=0 // pred_fallthru
    _
  %v26 = vld [vmem:[%s0] sm:$0xff]
  %v27 = vld [vmem:[%s1] sm:$0xff]
  %v28 = vld [vmem:[%s1 + $0x8] sm:$0xff]
  %v29 = vld [vmem:[%s4] sm:$0x1]
  %v31 = vlaneseq
  %v32 = vshrl.u32 %v31, 7
  %v33 = vsub.s32 0, %v32
  %v34 = vrot.slane %v29, %v33
  %vm36 = vcmask 130048
  %v38 = vsel %vm36, %v26, 0
  %40 = vmatprep.subr.mxu0 0.0
  %41 = vmatpush1.msra.mxu0 %v27
  %42 = vmatprep.subr.mxu0 0.0
  %43 = vmatpush1.msra.mxu0 %v28
  %44 = vmatprep.subr.mxu0 0.0
  %45 = vmatpush1.msra.mxu0 0.0
  %46 = vmatprep.subr.mxu0 0.0
  %47 = vmatpush1.msra.mxu0 0.0
  %48 = vmatprep.subr.mxu0 0.0
  %49 = vmatpush1.msra.mxu0 0.0
  %50 = vmatprep.subr.mxu0 0.0
  %51 = vmatpush1.msra.mxu0 0.0
  %52 = vmatprep.subr.mxu0 0.0
  %53 = vmatpush1.msra.mxu0 0.0
  %54 = vmatprep.subr.mxu0 0.0
  %55 = vmatpush1.msra.mxu0 0.0
  %56 = vmatprep.subr.mxu0 0.0
  %57 = vmatpush1.msra.mxu0 0.0
  %58 = vmatprep.subr.mxu0 0.0
  %59 = vmatpush1.msra.mxu0 0.0
  %60 = vmatprep.subr.mxu0 0.0
  %61 = vmatpush1.msra.mxu0 0.0
  %62 = vmatprep.subr.mxu0 0.0
  %63 = vmatpush1.msra.mxu0 0.0
  %64 = vmatprep.subr.mxu0 0.0
  %65 = vmatpush1.msra.mxu0 0.0
  %66 = vmatprep.subr.mxu0 0.0
  %67 = vmatpush1.msra.mxu0 0.0
  %68 = vmatprep.subr.mxu0 0.0
  %69 = vmatpush1.msra.mxu0 0.0
  %70 = vmatprep.subr.mxu0 0.0
  %71 = vmatpush1.msra.mxu0 0.0
  %72 = vmatprep.subr.mxu0 0.0
  %73 = vmatpush1.msra.mxu0 0.0
  %74 = vmatprep.subr.mxu0 0.0
  %75 = vmatpush1.msra.mxu0 0.0
  %76 = vmatprep.subr.mxu0 0.0
  %77 = vmatpush1.msra.mxu0 0.0
  %78 = vmatprep.subr.mxu0 0.0
  %79 = vmatpush1.msra.mxu0 0.0
  %80 = vmatprep.subr.mxu0 0.0
  %81 = vmatpush1.msra.mxu0 0.0
  %82 = vmatprep.subr.mxu0 0.0
  %83 = vmatpush1.msra.mxu0 0.0
  %84 = vmatprep.subr.mxu0 0.0
  %85 = vmatpush1.msra.mxu0 0.0
  %86 = vmatprep.subr.mxu0 0.0
  %87 = vmatpush1.msra.mxu0 0.0
  %88 = vmatprep.subr.mxu0 0.0
  %89 = vmatpush1.msra.mxu0 0.0
  %90 = vmatprep.subr.mxu0 0.0
  %91 = vmatpush1.msra.mxu0 0.0
  %92 = vmatprep.subr.mxu0 0.0
  %93 = vmatpush1.msra.mxu0 0.0
  %94 = vmatprep.subr.mxu0 0.0
  %95 = vmatpush1.msra.mxu0 0.0
  %96 = vmatprep.subr.mxu0 0.0
  %97 = vmatpush1.msra.mxu0 0.0
  %98 = vmatprep.subr.mxu0 0.0
  %99 = vmatpush1.msra.mxu0 0.0
  %100 = vmatprep.subr.mxu0 0.0
  %101 = vmatpush1.msra.mxu0 0.0
  %102 = vmatprep.subr.mxu0 0.0
  %103 = vmatpush1.msra.mxu0 0.0
  %104 = vmatprep.mubr.f32.mxu0 0.0
  %105 = vmatmul.mubr.f32.gmra.mrb[0].mxu0 %v38
  %v106 = vpop.f32.mrb[0].mxu0
  %v107 = vadd.f32 %v34, %v106
  %v108 = vpop.f32.mrb[0].mxu0
  %109 = vdwg.mxu0
  %v110 = vmax.f32 %v107, 0.0
  %v111 = vld [vmem:[%s2] sm:$0xff]
  %v112 = vld [vmem:[%s2 + $0x8] sm:$0xff]
  %v113 = vld [vmem:[%s2 + $0x10] sm:$0xff]
  %v114 = vld [vmem:[%s2 + $0x18] sm:$0xff]
  %v115 = vld [vmem:[%s5] sm:$0x1]
  %v117 = vlaneseq
  %v118 = vshrl.u32 %v117, 7
  %v119 = vsub.s32 0, %v118
  %v120 = vrot.slane %v115, %v119
  %vm122 = vcmask 261120
  %v124 = vsel %vm122, %v110, 0
  %126 = vmatprep.subr.mxu0 0.0
  %127 = vmatpush1.msra.mxu0 %v111
  %128 = vmatprep.subr.mxu0 0.0
  %129 = vmatpush1.msra.mxu0 %v112
  %130 = vmatprep.subr.mxu0 0.0
  %131 = vmatpush1.msra.mxu0 %v113
  %132 = vmatprep.subr.mxu0 0.0
  %133 = vmatpush1.msra.mxu0 %v114
  %134 = vmatprep.subr.mxu0 0.0
  %135 = vmatpush1.msra.mxu0 0.0
  %136 = vmatprep.subr.mxu0 0.0
  %137 = vmatpush1.msra.mxu0 0.0
  %138 = vmatprep.subr.mxu0 0.0
  %139 = vmatpush1.msra.mxu0 0.0
  %140 = vmatprep.subr.mxu0 0.0
  %141 = vmatpush1.msra.mxu0 0.0
  %142 = vmatprep.subr.mxu0 0.0
  %143 = vmatpush1.msra.mxu0 0.0
  %144 = vmatprep.subr.mxu0 0.0
  %145 = vmatpush1.msra.mxu0 0.0
  %146 = vmatprep.subr.mxu0 0.0
  %147 = vmatpush1.msra.mxu0 0.0
  %148 = vmatprep.subr.mxu0 0.0
  %149 = vmatpush1.msra.mxu0 0.0
  %150 = vmatprep.subr.mxu0 0.0
  %151 = vmatpush1.msra.mxu0 0.0
  %152 = vmatprep.subr.mxu0 0.0
  %153 = vmatpush1.msra.mxu0 0.0
  %154 = vmatprep.subr.mxu0 0.0
  %155 = vmatpush1.msra.mxu0 0.0
  %156 = vmatprep.subr.mxu0 0.0
  %157 = vmatpush1.msra.mxu0 0.0
  %158 = vmatprep.subr.mxu0 0.0
  %159 = vmatpush1.msra.mxu0 0.0
  %160 = vmatprep.subr.mxu0 0.0
  %161 = vmatpush1.msra.mxu0 0.0
  %162 = vmatprep.subr.mxu0 0.0
  %163 = vmatpush1.msra.mxu0 0.0
  %164 = vmatprep.subr.mxu0 0.0
  %165 = vmatpush1.msra.mxu0 0.0
  %166 = vmatprep.subr.mxu0 0.0
  %167 = vmatpush1.msra.mxu0 0.0
  %168 = vmatprep.subr.mxu0 0.0
  %169 = vmatpush1.msra.mxu0 0.0
  %170 = vmatprep.subr.mxu0 0.0
  %171 = vmatpush1.msra.mxu0 0.0
  %172 = vmatprep.subr.mxu0 0.0
  %173 = vmatpush1.msra.mxu0 0.0
  %174 = vmatprep.subr.mxu0 0.0
  %175 = vmatpush1.msra.mxu0 0.0
  %176 = vmatprep.subr.mxu0 0.0
  %177 = vmatpush1.msra.mxu0 0.0
  %178 = vmatprep.subr.mxu0 0.0
  %179 = vmatpush1.msra.mxu0 0.0
  %180 = vmatprep.subr.mxu0 0.0
  %181 = vmatpush1.msra.mxu0 0.0
  %182 = vmatprep.subr.mxu0 0.0
  %183 = vmatpush1.msra.mxu0 0.0
  %184 = vmatprep.subr.mxu0 0.0
  %185 = vmatpush1.msra.mxu0 0.0
  %186 = vmatprep.subr.mxu0 0.0
  %187 = vmatpush1.msra.mxu0 0.0
  %188 = vmatprep.subr.mxu0 0.0
  %189 = vmatpush1.msra.mxu0 0.0
  %190 = vmatprep.mubr.f32.mxu0 0.0
  %191 = vmatmul.mubr.f32.gmra.mrb[0].mxu0 %v124
  %v192 = vpop.f32.mrb[0].mxu0
  %v193 = vadd.f32 %v120, %v192
  %v194 = vpop.f32.mrb[0].mxu0
  %195 = vdwg.mxu0
  %v196 = vmax.f32 %v193, 0.0
  %v197 = vld [vmem:[%s3] sm:$0xff]
  %v198 = vld [vmem:[%s3 + $0x8] sm:$0xff]
  %v199 = vld [vmem:[%s3 + $0x10] sm:$0xff]
  %v200 = vld [vmem:[%s3 + $0x18] sm:$0xff]
  %v201 = vld [vmem:[%s3 + $0x20] sm:$0xff]
  %v202 = vld [vmem:[%s3 + $0x28] sm:$0xff]
  %v203 = vld [vmem:[%s3 + $0x30] sm:$0xff]
  %v204 = vld [vmem:[%s3 + $0x38] sm:$0xff]
  %v205 = vld [vmem:[%s6] sm:$0x1]
  %v207 = vlaneseq
  %v208 = vshrl.u32 %v207, 7
  %v209 = vsub.s32 0, %v208
  %v210 = vrot.slane %v205, %v209
  %vm212 = vcmask 523264
  %v214 = vsel %vm212, %v196, 0
  %216 = vmatprep.subr.mxu0 0.0
  %217 = vmatpush1.msra.mxu0 %v197
  %218 = vmatprep.subr.mxu0 0.0
  %219 = vmatpush1.msra.mxu0 %v198
  %220 = vmatprep.subr.mxu0 0.0
  %221 = vmatpush1.msra.mxu0 %v199
  %222 = vmatprep.subr.mxu0 0.0
  %223 = vmatpush1.msra.mxu0 %v200
  %224 = vmatprep.subr.mxu0 0.0
  %225 = vmatpush1.msra.mxu0 %v201
  %226 = vmatprep.subr.mxu0 0.0
  %227 = vmatpush1.msra.mxu0 %v202
  %228 = vmatprep.subr.mxu0 0.0
  %229 = vmatpush1.msra.mxu0 %v203
  %230 = vmatprep.subr.mxu0 0.0
  %231 = vmatpush1.msra.mxu0 %v204
  %232 = vmatprep.subr.mxu0 0.0
  %233 = vmatpush1.msra.mxu0 0.0
  %234 = vmatprep.subr.mxu0 0.0
  %235 = vmatpush1.msra.mxu0 0.0
  %236 = vmatprep.subr.mxu0 0.0
  %237 = vmatpush1.msra.mxu0 0.0
  %238 = vmatprep.subr.mxu0 0.0
  %239 = vmatpush1.msra.mxu0 0.0
  %240 = vmatprep.subr.mxu0 0.0
  %241 = vmatpush1.msra.mxu0 0.0
  %242 = vmatprep.subr.mxu0 0.0
  %243 = vmatpush1.msra.mxu0 0.0
  %244 = vmatprep.subr.mxu0 0.0
  %245 = vmatpush1.msra.mxu0 0.0
  %246 = vmatprep.subr.mxu0 0.0
  %247 = vmatpush1.msra.mxu0 0.0
  %248 = vmatprep.subr.mxu0 0.0
  %249 = vmatpush1.msra.mxu0 0.0
  %250 = vmatprep.subr.mxu0 0.0
  %251 = vmatpush1.msra.mxu0 0.0
  %252 = vmatprep.subr.mxu0 0.0
  %253 = vmatpush1.msra.mxu0 0.0
  %254 = vmatprep.subr.mxu0 0.0
  %255 = vmatpush1.msra.mxu0 0.0
  %256 = vmatprep.subr.mxu0 0.0
  %257 = vmatpush1.msra.mxu0 0.0
  %258 = vmatprep.subr.mxu0 0.0
  %259 = vmatpush1.msra.mxu0 0.0
  %260 = vmatprep.subr.mxu0 0.0
  %261 = vmatpush1.msra.mxu0 0.0
  %262 = vmatprep.subr.mxu0 0.0
  %263 = vmatpush1.msra.mxu0 0.0
  %264 = vmatprep.subr.mxu0 0.0
  %265 = vmatpush1.msra.mxu0 0.0
  %266 = vmatprep.subr.mxu0 0.0
  %267 = vmatpush1.msra.mxu0 0.0
  %268 = vmatprep.subr.mxu0 0.0
  %269 = vmatpush1.msra.mxu0 0.0
  %270 = vmatprep.subr.mxu0 0.0
  %271 = vmatpush1.msra.mxu0 0.0
  %272 = vmatprep.subr.mxu0 0.0
  %273 = vmatpush1.msra.mxu0 0.0
  %274 = vmatprep.subr.mxu0 0.0
  %275 = vmatpush1.msra.mxu0 0.0
  %276 = vmatprep.subr.mxu0 0.0
  %277 = vmatpush1.msra.mxu0 0.0
  %278 = vmatprep.subr.mxu0 0.0
  %279 = vmatpush1.msra.mxu0 0.0
  %280 = vmatprep.mubr.f32.mxu0 0.0
  %281 = vmatmul.mubr.f32.gmra.mrb[0].mxu0 %v214
  %v282 = vpop.f32.mrb[0].mxu0
  %v283 = vadd.f32 %v210, %v282
  %v284 = vpop.f32.mrb[0].mxu0
  %285 = vdwg.mxu0
  %vm286 = vcmask 31744
  %287 = vst.msk [vmem:[%s7] sm:$0xff] %vm286, %v283
  // Predicated region
  $region30: #{q_network_forward.1} parent=0 // pred_check
    _
  $region31: #{q_network_forward.1} parent=0 // pred_check_branch
    %289 = sbr.rel (0) target = $region33
  $region32: #{q_network_forward.1} parent=0 // pred_region
    _
  $region33: #{q_network_forward.1} parent=0 // pred_fallthru
    _
  // Predicated region
  $region34: #{q_network_forward.1} parent=0 // pred_check
    _
  $region35: #{q_network_forward.1} parent=0 // pred_check_branch
    %291 = sbr.rel (0) target = $region37
  $region36: #{q_network_forward.1} parent=0 // pred_region
    _
  $region37: #{q_network_forward.1} parent=0 // pred_fallthru
    _

</llo_original>
